<compile_context>
chip_gen: v7x
topology: tpu7x:2x2x1
jax: 0.10.0
libtpu: 0.0.40
codegen_flags: <defaults>
</compile_context>

<pallas_src>
import functools
import math

import jax
import jax.numpy as jnp
from jax.experimental import pallas as pl
from jax.experimental.pallas import tpu as pltpu

DEFAULT_1D_KERNEL_SIZE = 3
DEFAULT_1D_PADDING = 1
GN_EPS = 1e-5
_INV_SQRT2 = 0.7071067811865476

# Per-step VMEM working budget used to derive tile_l (double-buffered in+out
# tiles).  Conservative enough for v7x (64 MiB physical VMEM); the explicit
# vmem_limit below raises the 16/32 MiB default scoped ceiling on v5e/v6e/v7x.
_VMEM_TILE_BUDGET = 20 * 1024 * 1024
_VMEM_LIMIT_BYTES = 48 * 1024 * 1024


def _round_down(a, b):
    return (a // b) * b


def _pick_tile_l(l_out, bytes_per_col, tile_max):
    """Largest L tile (multiple of 128, <= l_out) fitting the VMEM budget."""
    if l_out <= 128:
        return int(l_out)                      # one full block (== array dim)
    cap = max(128, _round_down(_VMEM_TILE_BUDGET // max(bytes_per_col, 1), 128))
    return int(min(tile_max, cap, _round_down(l_out, 128)))


# ---------------------------------------------------------------------------
# Pass 1: stride-2 conv as a single stacked matmul + per-tile channel stats.
# ---------------------------------------------------------------------------
def _conv_stats_kernel(x_ref, w_ref, b_ref, y_ref, s_ref, q_ref, *,
                       ragged, valid_cols):
    # x_ref : (1, 3*C_in, TILE_L)  channel-stacked stride-2 shifted views
    # w_ref : (C_out, 3*C_in)
    # b_ref : (C_out, 1)
    # y_ref : (1, C_out, TILE_L)   conv output (NCL layout, lanes = L)
    # s_ref : (1, 1, C_out)        per-tile channel sum          (lane dense)
    # q_ref : (1, 1, C_out)        per-tile channel sum of sq.   (lane dense)
    y = jnp.dot(w_ref[...], x_ref[0], preferred_element_type=jnp.float32)
    y = y + b_ref[...]                                   # (C_out, TILE_L) f32
    y_ref[0] = y.astype(y_ref.dtype)                     # bf16/f32 store

    def _stats(v):
        s_ref[0] = jnp.sum(v, axis=1)[None, :]           # (1, C_out)
        q_ref[0] = jnp.sum(v * v, axis=1)[None, :]       # (1, C_out)

    if ragged:
        is_last = pl.program_id(1) == pl.num_programs(1) - 1

        @pl.when(is_last)
        def _():
            # Only the ragged last tile pays the mask: out-of-range columns
            # hold unspecified data and must not pollute the GN statistics.
            col = jax.lax.broadcasted_iota(jnp.int32, y.shape, 1)
            _stats(jnp.where(col < valid_cols, y, 0.0))

        @pl.when(jnp.logical_not(is_last))
        def _():
            _stats(y)
    else:
        _stats(y)


# ---------------------------------------------------------------------------
# Pass 2: fused GroupNorm affine (one FMA) + exact-erf GELU.
# ---------------------------------------------------------------------------
def _norm_gelu_kernel(y_ref, scale_ref, shift_ref, o_ref):
    # y_ref     : (1, C_out, TILE_L)  bf16/f32 conv output
    # scale_ref : (1, C_out, 1)  = gamma / sqrt(var + eps)   (per batch)
    # shift_ref : (1, C_out, 1)  = beta - mean * scale
    z = y_ref[0].astype(jnp.float32) * scale_ref[0] + shift_ref[0]
    o_ref[0] = (0.5 * z * (1.0 + jax.lax.erf(z * _INV_SQRT2))).astype(o_ref.dtype)


def downsample_layer(x, weight, bias, gamma, beta, *, num_groups,
                     use_bf16_matmul=True, y_dtype=jnp.bfloat16,
                     out_dtype=jnp.float32, tile_l_max=1024, tile_l2_max=2048):
    """x: (B, C_in, L) f32 -> (B, C_out, L_out) in PyTorch NCL layout."""
    B, C_in, L = x.shape
    C_out, _, K = weight.shape
    assert K == DEFAULT_1D_KERNEL_SIZE
    pad, stride = DEFAULT_1D_PADDING, 2
    L_out = (L + 2 * pad - K) // stride + 1
    c_per_group = C_out // num_groups
    assert c_per_group * num_groups == C_out

    x_dtype = jnp.bfloat16 if use_bf16_matmul else jnp.float32
    x_bytes = jnp.dtype(x_dtype).itemsize
    y_bytes = jnp.dtype(y_dtype).itemsize
    out_bytes = jnp.dtype(out_dtype).itemsize

    # ---- light preprocessing (one XLA loop fusion under jit): pad + three
    #      stride-2 shifted views stacked along channels -> single matmul ----
    xp = jnp.pad(x, ((0, 0), (0, 0), (pad, pad)))               # (B, C_in, L+2)
    x_stk = jnp.concatenate(
        [xp[:, :, 0:2 * L_out:2],                               # x_pad[2l]
         xp[:, :, 1:2 * L_out:2],                               # x_pad[2l+1]
         xp[:, :, 2:2 * L_out + 1:2]],                          # x_pad[2l+2]
        axis=1).astype(x_dtype)                                 # (B, 3*C_in, L_out)
    # w_flat[c, k*C_in + i] = weight[c, i, k]
    w_flat = jnp.transpose(weight, (0, 2, 1)).reshape(C_out, K * C_in).astype(x_dtype)
    b_col = bias.reshape(C_out, 1).astype(jnp.float32)

    # ---- pass 1: conv + per-tile channel sum / sum-of-squares --------------
    tile_l = _pick_tile_l(L_out, 2 * (3 * C_in * x_bytes + C_out * y_bytes),
                          tile_l_max)
    n_lt = pl.cdiv(L_out, tile_l)
    ragged = (L_out % tile_l) != 0
    valid_cols = L_out - (n_lt - 1) * tile_l                    # cols in last tile

    conv_kernel = functools.partial(_conv_stats_kernel, ragged=ragged,
                                    valid_cols=valid_cols)
    y, s_part, q_part = pl.pallas_call(
        conv_kernel,
        out_shape=(
            jax.ShapeDtypeStruct((B, C_out, L_out), y_dtype),
            jax.ShapeDtypeStruct((B, n_lt, C_out), jnp.float32),
            jax.ShapeDtypeStruct((B, n_lt, C_out), jnp.float32),
        ),
        grid_spec=pltpu.PrefetchScalarGridSpec(
            num_scalar_prefetch=0,
            grid=(B, n_lt),
            in_specs=[
                pl.BlockSpec((1, 3 * C_in, tile_l), lambda b, l: (b, 0, l)),
                pl.BlockSpec((C_out, 3 * C_in), lambda b, l: (0, 0)),
                pl.BlockSpec((C_out, 1), lambda b, l: (0, 0)),
            ],
            out_specs=(
                pl.BlockSpec((1, C_out, tile_l), lambda b, l: (b, 0, l)),
                pl.BlockSpec((1, 1, C_out), lambda b, l: (b, l, 0)),
                pl.BlockSpec((1, 1, C_out), lambda b, l: (b, l, 0)),
            ),
        ),
        compiler_params=pltpu.CompilerParams(
            dimension_semantics=("parallel", "parallel"),
            vmem_limit_bytes=_VMEM_LIMIT_BYTES),
    )(x_stk, w_flat, b_col)

    # ---- tiny (B x C_out) group-stat reduction + fused affine (plain JAX) --
    s_c = jnp.sum(s_part, axis=1)                               # (B, C_out)
    q_c = jnp.sum(q_part, axis=1)
    n = c_per_group * L_out
    s_g = s_c.reshape(B, num_groups, c_per_group).sum(-1)       # (B, G)
    q_g = q_c.reshape(B, num_groups, c_per_group).sum(-1)
    mean_g = s_g / n
    var_g = jnp.maximum(q_g / n - mean_g * mean_g, 0.0)         # biased (torch GN)
    inv_g = jax.lax.rsqrt(var_g + GN_EPS)
    mean_c = jnp.repeat(mean_g, c_per_group, axis=1)            # (B, C_out)
    inv_c = jnp.repeat(inv_g, c_per_group, axis=1)
    scale_c = (inv_c * gamma[None, :])[:, :, None].astype(jnp.float32)
    shift_c = (beta[None, :] - mean_c * inv_c * gamma[None, :]
               )[:, :, None].astype(jnp.float32)                # (B, C_out, 1)

    # ---- pass 2: GroupNorm FMA + exact-erf GELU, written at L_out directly --
    tile_l2 = _pick_tile_l(L_out, 2 * C_out * (y_bytes + out_bytes), tile_l2_max)
    n_lt2 = pl.cdiv(L_out, tile_l2)

    out = pl.pallas_call(
        _norm_gelu_kernel,
        out_shape=jax.ShapeDtypeStruct((B, C_out, L_out), out_dtype),
        grid_spec=pltpu.PrefetchScalarGridSpec(
            num_scalar_prefetch=0,
            grid=(B, n_lt2),
            in_specs=[
                pl.BlockSpec((1, C_out, tile_l2), lambda b, l: (b, 0, l)),
                pl.BlockSpec((1, C_out, 1), lambda b, l: (b, 0, 0)),
                pl.BlockSpec((1, C_out, 1), lambda b, l: (b, 0, 0)),
            ],
            out_specs=pl.BlockSpec((1, C_out, tile_l2), lambda b, l: (b, 0, l)),
        ),
        compiler_params=pltpu.CompilerParams(
            dimension_semantics=("parallel", "parallel"),
            vmem_limit_bytes=_VMEM_LIMIT_BYTES),
    )(y, scale_c, shift_c)

    return out                                                  # (B, C_out, L_out)


def _reference(x, weight, bias, gamma, beta, *, num_groups):
    """Pure-JAX reference matching the PyTorch module semantics."""
    y = jax.lax.conv_general_dilated(
        x, weight, window_strides=(2,), padding=[(DEFAULT_1D_PADDING,) * 2],
        dimension_numbers=("NCH", "OIH", "NCH"),
        precision=jax.lax.Precision.HIGHEST)
    y = y + bias[None, :, None]
    B, C, L = y.shape
    yg = y.reshape(B, num_groups, (C // num_groups) * L)
    mean = yg.mean(axis=-1, keepdims=True)
    var = yg.var(axis=-1, keepdims=True)
    yn = ((yg - mean) / jnp.sqrt(var + GN_EPS)).reshape(B, C, L)
    yn = yn * gamma[None, :, None] + beta[None, :, None]
    return 0.5 * yn * (1.0 + jax.lax.erf(yn / jnp.sqrt(2.0)))


if __name__ == "__main__":
    def run_case(key, B, C_in, C_out, L, tol, **kwargs):
        K = DEFAULT_1D_KERNEL_SIZE
        num_groups = C_out // 4
        kx, kw, kb, kg, kbe = jax.random.split(key, 5)
        x = jax.random.normal(kx, (B, C_in, L), dtype=jnp.float32)
        bound = 1.0 / math.sqrt(C_in * K)
        weight = jax.random.uniform(kw, (C_out, C_in, K), dtype=jnp.float32,
                                    minval=-bound, maxval=bound)
        bias = jax.random.uniform(kb, (C_out,), dtype=jnp.float32,
                                  minval=-bound, maxval=bound)
        gamma = 1.0 + 0.1 * jax.random.normal(kg, (C_out,), dtype=jnp.float32)
        beta = 0.1 * jax.random.normal(kbe, (C_out,), dtype=jnp.float32)

        fn = jax.jit(functools.partial(downsample_layer,
                                       num_groups=num_groups, **kwargs))
        out = jax.block_until_ready(fn(x, weight, bias, gamma, beta))

        L_out = (L + 2 * DEFAULT_1D_PADDING - K) // 2 + 1
        assert out.shape == (B, C_out, L_out), out.shape
        ref = _reference(x, weight, bias, gamma, beta, num_groups=num_groups)
        err = float(jnp.max(jnp.abs(out.astype(jnp.float32) - ref)))
        assert err <= tol, f"max abs err {err} > tol {tol}"

    key = jax.random.PRNGKey(0)
    k1, k2 = jax.random.split(key)
    # Exact-f32 path at the module's small spec shapes (strict check).
    run_case(k1, B=2, C_in=4, C_out=8, L=16, tol=1e-4,
             use_bf16_matmul=False, y_dtype=jnp.float32)
    # Default fast path (bf16 MXU inputs + bf16 intermediate y): exercises
    # >128-wide L tiling, the ragged last tile and its stats mask.
    run_case(k2, B=2, C_in=8, C_out=16, L=600, tol=8e-2)
    print("KERNEL_OK")
</pallas_src>

<mosaic_0001>
module attributes {stable_mosaic.version = 11 : i64} {
  func.func @_conv_stats_kernel(%arg0: i32, %arg1: i32, %arg2: memref<1x12x8xf32, #tpu.memory_space<vmem>>, %arg3: memref<8x12xf32, #tpu.memory_space<vmem>>, %arg4: memref<8x1xf32, #tpu.memory_space<vmem>>, %arg5: memref<1x8x8xf32, #tpu.memory_space<vmem>>, %arg6: memref<1x1x8xf32, #tpu.memory_space<vmem>>, %arg7: memref<1x1x8xf32, #tpu.memory_space<vmem>>) attributes {dimension_semantics = [#tpu.dimension_semantics<parallel>, #tpu.dimension_semantics<parallel>], iteration_bounds = array<i64: 2, 1>, scalar_prefetch = 0 : i64, scratch_operands = 0 : i64, tpu.core_type = #tpu.core_type<tc>, window_params = [{transform_indices = @transform_0, window_bounds = array<i64: 1, 12, 8>}, {pipeline_mode = #tpu.pipeline_mode<synchronous>, transform_indices = @transform_1, window_bounds = array<i64: 8, 12>}, {pipeline_mode = #tpu.pipeline_mode<synchronous>, transform_indices = @transform_2, window_bounds = array<i64: 8, 1>}, {transform_indices = @transform_3, window_bounds = array<i64: 1, 8, 8>}, {transform_indices = @transform_4, window_bounds = array<i64: 1, 1, 8>}, {transform_indices = @transform_5, window_bounds = array<i64: 1, 1, 8>}]} {
    %c0 = arith.constant 0 : index
    %c0_0 = arith.constant 0 : index
    %0 = vector.load %arg3[%c0, %c0_0] : memref<8x12xf32, #tpu.memory_space<vmem>>, vector<8x12xf32>
    %c0_1 = arith.constant 0 : index
    %c0_2 = arith.constant 0 : index
    %c0_3 = arith.constant 0 : index
    %1 = vector.load %arg2[%c0_1, %c0_2, %c0_3] : memref<1x12x8xf32, #tpu.memory_space<vmem>>, vector<1x12x8xf32>
    %2 = vector.shape_cast %1 : vector<1x12x8xf32> to vector<12x8xf32>
    %cst = arith.constant dense<0.000000e+00> : vector<8x8xf32>
    %3 = tpu.matmul %0, %2, %cst {dimension_numbers = #tpu.dot_dimension_numbers<[1], [0], [0], [1], [0, 0, 1, 1], [], []>} : vector<8x12xf32>, vector<12x8xf32>, vector<8x8xf32> -> vector<8x8xf32>
    %c0_4 = arith.constant 0 : index
    %c0_5 = arith.constant 0 : index
    %4 = vector.load %arg4[%c0_4, %c0_5] : memref<8x1xf32, #tpu.memory_space<vmem>>, vector<8x1xf32>
    %5 = vector.broadcast %4 : vector<8x1xf32> to vector<8x8xf32>
    %6 = arith.addf %3, %5 : vector<8x8xf32>
    %c0_6 = arith.constant 0 : index
    %c0_7 = arith.constant 0 : index
    %c0_8 = arith.constant 0 : index
    %7 = vector.load %arg5[%c0_6, %c0_7, %c0_8] : memref<1x8x8xf32, #tpu.memory_space<vmem>>, vector<1x8x8xf32>
    %8 = vector.shape_cast %7 : vector<1x8x8xf32> to vector<8x8xf32>
    %9 = vector.shape_cast %6 : vector<8x8xf32> to vector<1x8x8xf32>
    tpu.vector_store %arg5[%c0_6, %c0_7, %c0_8], %9 {strides = array<i32>} : memref<1x8x8xf32, #tpu.memory_space<vmem>>, vector<1x8x8xf32>,
    %cst_9 = arith.constant dense<0.000000e+00> : vector<8xf32>
    %10 = vector.multi_reduction <add>, %6, %cst_9 [1] : vector<8x8xf32> to vector<8xf32>
    %11 = vector.shape_cast %10 : vector<8xf32> to vector<1x8xf32>
    %c0_10 = arith.constant 0 : index
    %c0_11 = arith.constant 0 : index
    %c0_12 = arith.constant 0 : index
    %12 = vector.load %arg6[%c0_10, %c0_11, %c0_12] : memref<1x1x8xf32, #tpu.memory_space<vmem>>, vector<1x1x8xf32>
    %13 = vector.shape_cast %12 : vector<1x1x8xf32> to vector<1x8xf32>
    %14 = vector.shape_cast %11 : vector<1x8xf32> to vector<1x1x8xf32>
    tpu.vector_store %arg6[%c0_10, %c0_11, %c0_12], %14 {strides = array<i32>} : memref<1x1x8xf32, #tpu.memory_space<vmem>>, vector<1x1x8xf32>,
    %15 = arith.mulf %6, %6 : vector<8x8xf32>
    %cst_13 = arith.constant dense<0.000000e+00> : vector<8xf32>
    %16 = vector.multi_reduction <add>, %15, %cst_13 [1] : vector<8x8xf32> to vector<8xf32>
    %17 = vector.shape_cast %16 : vector<8xf32> to vector<1x8xf32>
    %c0_14 = arith.constant 0 : index
    %c0_15 = arith.constant 0 : index
    %c0_16 = arith.constant 0 : index
    %18 = vector.load %arg7[%c0_14, %c0_15, %c0_16] : memref<1x1x8xf32, #tpu.memory_space<vmem>>, vector<1x1x8xf32>
    %19 = vector.shape_cast %18 : vector<1x1x8xf32> to vector<1x8xf32>
    %20 = vector.shape_cast %17 : vector<1x8xf32> to vector<1x1x8xf32>
    tpu.vector_store %arg7[%c0_14, %c0_15, %c0_16], %20 {strides = array<i32>} : memref<1x1x8xf32, #tpu.memory_space<vmem>>, vector<1x1x8xf32>,
    return
  }
  func.func @transform_0(%arg0: i32, %arg1: i32) -> (i32, i32, i32) {
    %c0_i32 = arith.constant 0 : i32
    %c0_i32_0 = arith.constant 0 : i32
    return %arg0, %c0_i32, %arg1 : i32, i32, i32
  }
  func.func @transform_1(%arg0: i32, %arg1: i32) -> (i32, i32) {
    %c0_i32 = arith.constant 0 : i32
    %c0_i32_0 = arith.constant 0 : i32
    %c0_i32_1 = arith.constant 0 : i32
    return %c0_i32, %c0_i32_0 : i32, i32
  }
  func.func @transform_2(%arg0: i32, %arg1: i32) -> (i32, i32) {
    %c0_i32 = arith.constant 0 : i32
    %c0_i32_0 = arith.constant 0 : i32
    %c0_i32_1 = arith.constant 0 : i32
    return %c0_i32, %c0_i32_0 : i32, i32
  }
  func.func @transform_3(%arg0: i32, %arg1: i32) -> (i32, i32, i32) {
    %c0_i32 = arith.constant 0 : i32
    %c0_i32_0 = arith.constant 0 : i32
    return %arg0, %c0_i32, %arg1 : i32, i32, i32
  }
  func.func @transform_4(%arg0: i32, %arg1: i32) -> (i32, i32, i32) {
    %c0_i32 = arith.constant 0 : i32
    %c0_i32_0 = arith.constant 0 : i32
    return %arg0, %arg1, %c0_i32 : i32, i32, i32
  }
  func.func @transform_5(%arg0: i32, %arg1: i32) -> (i32, i32, i32) {
    %c0_i32 = arith.constant 0 : i32
    %c0_i32_0 = arith.constant 0 : i32
    return %arg0, %arg1, %c0_i32 : i32, i32, i32
  }
}

module attributes {stable_mosaic.version = 11 : i64} {
  func.func @_norm_gelu_kernel(%arg0: i32, %arg1: i32, %arg2: memref<1x8x8xf32, #tpu.memory_space<vmem>>, %arg3: memref<1x8x1xf32, #tpu.memory_space<vmem>>, %arg4: memref<1x8x1xf32, #tpu.memory_space<vmem>>, %arg5: memref<1x8x8xf32, #tpu.memory_space<vmem>>) attributes {dimension_semantics = [#tpu.dimension_semantics<parallel>, #tpu.dimension_semantics<parallel>], iteration_bounds = array<i64: 2, 1>, scalar_prefetch = 0 : i64, scratch_operands = 0 : i64, tpu.core_type = #tpu.core_type<tc>, window_params = [{transform_indices = @transform_0, window_bounds = array<i64: 1, 8, 8>}, {transform_indices = @transform_1, window_bounds = array<i64: 1, 8, 1>}, {transform_indices = @transform_2, window_bounds = array<i64: 1, 8, 1>}, {transform_indices = @transform_3, window_bounds = array<i64: 1, 8, 8>}]} {
    %c0 = arith.constant 0 : index
    %c0_0 = arith.constant 0 : index
    %c0_1 = arith.constant 0 : index
    %0 = vector.load %arg2[%c0, %c0_0, %c0_1] : memref<1x8x8xf32, #tpu.memory_space<vmem>>, vector<1x8x8xf32>
    %1 = vector.shape_cast %0 : vector<1x8x8xf32> to vector<8x8xf32>
    %c0_2 = arith.constant 0 : index
    %c0_3 = arith.constant 0 : index
    %c0_4 = arith.constant 0 : index
    %2 = vector.load %arg3[%c0_2, %c0_3, %c0_4] : memref<1x8x1xf32, #tpu.memory_space<vmem>>, vector<1x8x1xf32>
    %3 = vector.shape_cast %2 : vector<1x8x1xf32> to vector<8x1xf32>
    %4 = vector.broadcast %3 : vector<8x1xf32> to vector<8x8xf32>
    %5 = arith.mulf %1, %4 : vector<8x8xf32>
    %c0_5 = arith.constant 0 : index
    %c0_6 = arith.constant 0 : index
    %c0_7 = arith.constant 0 : index
    %6 = vector.load %arg4[%c0_5, %c0_6, %c0_7] : memref<1x8x1xf32, #tpu.memory_space<vmem>>, vector<1x8x1xf32>
    %7 = vector.shape_cast %6 : vector<1x8x1xf32> to vector<8x1xf32>
    %8 = vector.broadcast %7 : vector<8x1xf32> to vector<8x8xf32>
    %9 = arith.addf %5, %8 : vector<8x8xf32>
    %cst = arith.constant 5.000000e-01 : f32
    %10 = vector.broadcast %cst : f32 to vector<8x8xf32>
    %11 = arith.mulf %10, %9 : vector<8x8xf32>
    %cst_8 = arith.constant 0.707106769 : f32
    %12 = vector.broadcast %cst_8 : f32 to vector<8x8xf32>
    %13 = arith.mulf %9, %12 : vector<8x8xf32>
    %14 = math.erf %13 : vector<8x8xf32>
    %cst_9 = arith.constant 1.000000e+00 : f32
    %15 = vector.broadcast %cst_9 : f32 to vector<8x8xf32>
    %16 = arith.addf %15, %14 : vector<8x8xf32>
    %17 = arith.mulf %11, %16 : vector<8x8xf32>
    %c0_10 = arith.constant 0 : index
    %c0_11 = arith.constant 0 : index
    %c0_12 = arith.constant 0 : index
    %18 = vector.load %arg5[%c0_10, %c0_11, %c0_12] : memref<1x8x8xf32, #tpu.memory_space<vmem>>, vector<1x8x8xf32>
    %19 = vector.shape_cast %18 : vector<1x8x8xf32> to vector<8x8xf32>
    %20 = vector.shape_cast %17 : vector<8x8xf32> to vector<1x8x8xf32>
    tpu.vector_store %arg5[%c0_10, %c0_11, %c0_12], %20 {strides = array<i32>} : memref<1x8x8xf32, #tpu.memory_space<vmem>>, vector<1x8x8xf32>,
    return
  }
  func.func @transform_0(%arg0: i32, %arg1: i32) -> (i32, i32, i32) {
    %c0_i32 = arith.constant 0 : i32
    %c0_i32_0 = arith.constant 0 : i32
    return %arg0, %c0_i32, %arg1 : i32, i32, i32
  }
  func.func @transform_1(%arg0: i32, %arg1: i32) -> (i32, i32, i32) {
    %c0_i32 = arith.constant 0 : i32
    %c0_i32_0 = arith.constant 0 : i32
    %c0_i32_1 = arith.constant 0 : i32
    return %arg0, %c0_i32, %c0_i32_0 : i32, i32, i32
  }
  func.func @transform_2(%arg0: i32, %arg1: i32) -> (i32, i32, i32) {
    %c0_i32 = arith.constant 0 : i32
    %c0_i32_0 = arith.constant 0 : i32
    %c0_i32_1 = arith.constant 0 : i32
    return %arg0, %c0_i32, %c0_i32_0 : i32, i32, i32
  }
  func.func @transform_3(%arg0: i32, %arg1: i32) -> (i32, i32, i32) {
    %c0_i32 = arith.constant 0 : i32
    %c0_i32_0 = arith.constant 0 : i32
    return %arg0, %c0_i32, %arg1 : i32, i32, i32
  }
}

</mosaic_0001>

<llo_original>
// kernel: downsample_layer.3
$region0: #{downsample_layer.3}
  #allocation0 [shape = 'u32[]', space=smem, size = 0x4, offset = 0x4, fixed_abs, tag = 'smem constant byte address 0x4 - core index']
  #allocation1 [shape = 'u32[144,128]{1,0:T(1,128)}', space=vmem, size = 0x12000, scoped, tag = 'internal scratch']
  %s0 = inlined_call_operand.vmem [shape: f32[2,8,8], index: 0, kind: input, shape index: {}]
  %s1 = inlined_call_operand.vmem [shape: f32[2,8,1], index: 1, kind: input, shape index: {}]
  %s2 = inlined_call_operand.vmem [shape: f32[2,8,1], index: 2, kind: input, shape index: {}]
  %s3 = inlined_call_operand.hbm [shape: f32[2,8,8], index: 3, kind: output, shape index: {}]
  %s4 = sld [smem:[#allocation0]]
  $region45: #{downsample_layer.3} parent=0
    _
  %s6 = ssub.s32 1, %s4
  %s7 = scalar_select 0, %s6, %s4
  $region1: #{downsample_layer.3} parent=0
    #allocation2 [shape = 'u8[8192]{0}', space=vmem, size = 0x2000, scoped, tag = 'output window, operand 0']
    #allocation3 [shape = 's32[2]{0}', space=sflag, size = 0x8, scoped, tag = 'scoped memory for downsample_layer.3']
    %8 = vsyncpa [#allocation3], 0
    %s9 = scalar_lea.sflag [#allocation3], 1
    %10 = vsyncpa %s9, 0
    loop: start=0, step=1, limit=4
    $region2: #{downsample_layer.3} parent=1 // loop_pre_header
      _
    $region3: #{downsample_layer.3} parent=1 // loop_header
      %s12 = sphi 0, %s16
      %p13 = scmp.ge.s32.totalorder %s12, 4
      %s19 = sphi 0, %s31
      %s20 = sphi 0, %s27
      %s21 = sphi 0, %s19
      %s22 = sphi 0, %s20
      %s23 = sphi 0, %s21
      %s24 = sphi 0, %s22
      %s36 = sphi 0, %s38
      %s39 = sphi 0, %s36
      %s40 = sphi 0, %s39
      %s56 = sphi 0, %s40
      %s62 = sphi 0, %s64
      %s65 = sphi 0, %s62
      %s66 = sphi 0, %s65
      %s82 = sphi 0, %s66
      %s88 = sphi 0, %s90
      %s91 = sphi 0, %s88
      %s92 = sphi 0, %s91
      %s108 = sphi 0, %s92
      %s116 = sphi 0, %s118
      %s119 = sphi 0, %s116
      %s120 = sphi 0, %s119
      %s136 = sphi 0, %s120
    $region4: #{downsample_layer.3} parent=1 // loop_header_branch
      %15 = sbr.rel (%p13) target = $region8
    $region5: #{downsample_layer.3} parent=1 // loop_body
      %s17 = ssub.s32 %s12, 1
      %s18 = ssub.s32 %s12, 2
      %s25 = sadd.s32 1, %s20
      %p26 = scmp.ge.s32.totalorder %s25, 1
      %s27 = scalar_select %p26, 0, %s25
      %s28 = sadd.s32 1, %s19
      %s29 = scalar_select %p26, %s28, %s19
      %p30 = scmp.ge.s32.totalorder %s29, 2
      %s31 = scalar_select %p30, 0, %s29
      %s32 = ssub.s32 %s19, %s31
      %s33 = ssub.s32 %s20, %s27
      %s34 = sor.u32 %s32, %s33
      %p35 = scmp.eq.s32.totalorder %s34, 0
      %s37 = sadd.s32 %s36, 1
      %s38 = scalar_select %p35, %s36, %s37
      %p41 = pneg %p35
      %p42 = scmp.eq.s32.totalorder %s12, 1
      %p43 = por %p41, %p42
      %p44 = scmp.ne.s32.totalorder %s36, %s39
      %p45 = scmp.eq.s32.totalorder %s12, 0
      %p46 = por %p44, %p45
      %p47 = scmp.ne.s32.totalorder %s36, %s39
      %p48 = scmp.eq.s32.totalorder %s17, 1
      %p49 = por %p47, %p48
      %p50 = scmp.ne.s32.totalorder %s39, %s40
      %p51 = scmp.eq.s32.totalorder %s17, 0
      %p52 = por %p50, %p51
      %p53 = scmp.ne.s32.totalorder %s39, %s40
      %p54 = scmp.eq.s32.totalorder %s18, 1
      %p55 = por %p53, %p54
      %p57 = scmp.ne.s32.totalorder %s40, %s56
      %p58 = scmp.eq.s32.totalorder %s18, 0
      %p59 = por %p57, %p58
      %s60 = ssub.s32 %s19, %s31
      %p61 = scmp.eq.s32.totalorder %s60, 0
      %s63 = sadd.s32 %s62, 1
      %s64 = scalar_select %p61, %s62, %s63
      %p67 = pneg %p61
      %p68 = scmp.eq.s32.totalorder %s12, 1
      %p69 = por %p67, %p68
      %p70 = scmp.ne.s32.totalorder %s62, %s65
      %p71 = scmp.eq.s32.totalorder %s12, 0
      %p72 = por %p70, %p71
      %p73 = scmp.ne.s32.totalorder %s62, %s65
      %p74 = scmp.eq.s32.totalorder %s17, 1
      %p75 = por %p73, %p74
      %p76 = scmp.ne.s32.totalorder %s65, %s66
      %p77 = scmp.eq.s32.totalorder %s17, 0
      %p78 = por %p76, %p77
      %p79 = scmp.ne.s32.totalorder %s65, %s66
      %p80 = scmp.eq.s32.totalorder %s18, 1
      %p81 = por %p79, %p80
      %p83 = scmp.ne.s32.totalorder %s66, %s82
      %p84 = scmp.eq.s32.totalorder %s18, 0
      %p85 = por %p83, %p84
      %s86 = ssub.s32 %s19, %s31
      %p87 = scmp.eq.s32.totalorder %s86, 0
      %s89 = sadd.s32 %s88, 1
      %s90 = scalar_select %p87, %s88, %s89
      %p93 = pneg %p87
      %p94 = scmp.eq.s32.totalorder %s12, 1
      %p95 = por %p93, %p94
      %p96 = scmp.ne.s32.totalorder %s88, %s91
      %p97 = scmp.eq.s32.totalorder %s12, 0
      %p98 = por %p96, %p97
      %p99 = scmp.ne.s32.totalorder %s88, %s91
      %p100 = scmp.eq.s32.totalorder %s17, 1
      %p101 = por %p99, %p100
      %p102 = scmp.ne.s32.totalorder %s91, %s92
      %p103 = scmp.eq.s32.totalorder %s17, 0
      %p104 = por %p102, %p103
      %p105 = scmp.ne.s32.totalorder %s91, %s92
      %p106 = scmp.eq.s32.totalorder %s18, 1
      %p107 = por %p105, %p106
      %p109 = scmp.ne.s32.totalorder %s92, %s108
      %p110 = scmp.eq.s32.totalorder %s18, 0
      %p111 = por %p109, %p110
      %s112 = ssub.s32 %s19, %s31
      %s113 = ssub.s32 %s20, %s27
      %s114 = sor.u32 %s112, %s113
      %p115 = scmp.eq.s32.totalorder %s114, 0
      %s117 = sadd.s32 %s116, 1
      %s118 = scalar_select %p115, %s116, %s117
      %p121 = pneg %p115
      %p122 = scmp.eq.s32.totalorder %s12, 1
      %p123 = por %p121, %p122
      %p124 = scmp.ne.s32.totalorder %s116, %s119
      %p125 = scmp.eq.s32.totalorder %s12, 0
      %p126 = por %p124, %p125
      %p127 = scmp.ne.s32.totalorder %s116, %s119
      %p128 = scmp.eq.s32.totalorder %s17, 1
      %p129 = por %p127, %p128
      %p130 = scmp.ne.s32.totalorder %s119, %s120
      %p131 = scmp.eq.s32.totalorder %s17, 0
      %p132 = por %p130, %p131
      %p133 = scmp.ne.s32.totalorder %s119, %s120
      %p134 = scmp.eq.s32.totalorder %s18, 1
      %p135 = por %p133, %p134
      %p137 = scmp.ne.s32.totalorder %s120, %s136
      %p138 = scmp.eq.s32.totalorder %s18, 0
      %p139 = por %p137, %p138
      %p140 = scmp.le.s32.totalorder 1, %s12
      %p141 = scmp.lt.s32.totalorder %s12, 3
      %p142 = pnand %p140, %p141
      %p143 = pneg %p142
      // Predicated region
      $region9: #{downsample_layer.3} parent=5 // pred_check
        _
      $region10: #{downsample_layer.3} parent=5 // pred_check_branch
        %145 = sbr.rel (%p142) target = $region12
      $region11: #{downsample_layer.3} parent=5 // pred_region
        %s146 = ssub.s32 %s12, 1
      $region12: #{downsample_layer.3} parent=5 // pred_fallthru
        _
      %p147 = scmp.lt.s32.totalorder %s12, 2
      // Predicated region
      $region13: #{downsample_layer.3} parent=5 // pred_check
        %p148 = pneg %p147
      $region14: #{downsample_layer.3} parent=5 // pred_check_branch
        %150 = sbr.rel (%p148) target = $region16
      $region15: #{downsample_layer.3} parent=5 // pred_region
        // Predicated region
        $region17: #{downsample_layer.3} parent=15 // pred_check
          %p151 = pneg %p46
        $region18: #{downsample_layer.3} parent=15 // pred_check_branch
          %153 = sbr.rel (%p151) target = $region20
        $region19: #{downsample_layer.3} parent=15 // pred_region
          %p154 = scmp.lt.s32.totalorder %s19, 1
          %s155 = scalar_select %p154, %s19, 1
          %p156 = scmp.lt.s32.totalorder %s20, 0
          %s157 = scalar_select %p156, %s20, 0
          %s158 = sadd.s32 %s157, %s155
          %s159 = smul.addr %s158, 8
          %s160 = scalar_lea.vmem %s0, %s159
        $region20: #{downsample_layer.3} parent=15 // pred_fallthru
          _
        // Predicated region
        $region21: #{downsample_layer.3} parent=15 // pred_check
          %p161 = pneg %p72
        $region22: #{downsample_layer.3} parent=15 // pred_check_branch
          %163 = sbr.rel (%p161) target = $region24
        $region23: #{downsample_layer.3} parent=15 // pred_region
          %p164 = scmp.lt.s32.totalorder %s19, 1
          %s165 = scalar_select %p164, %s19, 1
          %s166 = smul.addr %s165, 8
          %s167 = scalar_lea.vmem %s1, %s166
        $region24: #{downsample_layer.3} parent=15 // pred_fallthru
          _
        // Predicated region
        $region25: #{downsample_layer.3} parent=15 // pred_check
          %p168 = pneg %p98
        $region26: #{downsample_layer.3} parent=15 // pred_check_branch
          %170 = sbr.rel (%p168) target = $region28
        $region27: #{downsample_layer.3} parent=15 // pred_region
          %p171 = scmp.lt.s32.totalorder %s19, 1
          %s172 = scalar_select %p171, %s19, 1
          %s173 = smul.addr %s172, 8
          %s174 = scalar_lea.vmem %s2, %s173
        $region28: #{downsample_layer.3} parent=15 // pred_fallthru
          _
      $region16: #{downsample_layer.3} parent=5 // pred_fallthru
        _
      %p175 = scmp.le.s32.totalorder 1, %s12
      %p176 = scmp.lt.s32.totalorder %s12, 3
      %p177 = pnand %p175, %p176
      %p178 = pneg %p177
      // Predicated region
      $region29: #{downsample_layer.3} parent=5 // pred_check
        _
      $region30: #{downsample_layer.3} parent=5 // pred_check_branch
        %180 = sbr.rel (%p177) target = $region32
      $region31: #{downsample_layer.3} parent=5 // pred_region
        %s181 = ssub.s32 %s12, 1
        %p182 = scmp.lt.s32.totalorder %s21, 1
        %s183 = scalar_select %p182, %s21, 1
        %p184 = scmp.lt.s32.totalorder %s22, 0
        %s185 = scalar_select %p184, %s22, 0
        %s186 = sadd.s32 %s185, %s183
        %s187 = smul.addr %s186, 8
        %s188 = scalar_lea.vmem %s0, %s187
        %p189 = pneg %p52
        %p190 = pneg %p49
        %p191 = scmp.lt.s32.totalorder %s21, 1
        %s192 = scalar_select %p191, %s21, 1
        %s193 = smul.addr %s192, 8
        %s194 = scalar_lea.vmem %s1, %s193
        %p195 = pneg %p78
        %p196 = pneg %p75
        %p197 = scmp.lt.s32.totalorder %s21, 1
        %s198 = scalar_select %p197, %s21, 1
        %s199 = smul.addr %s198, 8
        %s200 = scalar_lea.vmem %s2, %s199
        %p201 = pneg %p104
        %p202 = pneg %p101
        %p203 = pneg %p132
        %p204 = pneg %p129
        %s205 = sand.u32 %s119, 1
        %s206 = scalar_lea.sflag [#allocation3], %s205
        %s207 = sand.u32 %s119, 1
        %s208 = smul.addr %s207, 8
        %s209 = scalar_lea.vmem [#allocation2], %s208
        %p210 = scmp.lt.s32.totalorder %s21, 1
        %s211 = scalar_select %p210, %s21, 1
        %p212 = scmp.lt.s32.totalorder %s22, 0
        %s213 = scalar_select %p212, %s22, 0
        %s214 = sadd.s32 %s213, %s211
        %s215 = smul.addr %s214, 8
        %s216 = scalar_lea.vmem %s0, %s215
        %p217 = scmp.lt.s32.totalorder %s21, 1
        %s218 = scalar_select %p217, %s21, 1
        %s219 = smul.addr %s218, 8
        %s220 = scalar_lea.vmem %s1, %s219
        %p221 = scmp.lt.s32.totalorder %s21, 1
        %s222 = scalar_select %p221, %s21, 1
        %s223 = smul.addr %s222, 8
        %s224 = scalar_lea.vmem %s2, %s223
        %v225 = vld [vmem:[%s216] sm:$0xff]
        %v226 = vld [vmem:[%s220] sm:$0xff]
        %228 = vset.pattern.permute.xlu0 0
        %229 = vperm.xlu0 %228, %v226
        %v230 = vpop.permute.xlu0 %229
        %v232 = vmul.f32 %v225, %v230
        %v233 = vld [vmem:[%s224] sm:$0xff]
        %235 = vset.pattern.permute.xlu0 0
        %236 = vperm.xlu0 %235, %v233
        %v237 = vpop.permute.xlu0 %236
        %v239 = vadd.f32 %v232, %v237
        %v240 = vmul.f32 %v239, 0.5
        %v241 = vmul.f32 %v239, 0.70710677
        %v242 = verf.f32.pop %v241
        %v243 = vadd.f32 %v242, 1.0
        %v244 = vmul.f32 %v240, %v243
        %vm245 = vcmask 64512
        %246 = vst.msk [vmem:[%s209] sm:$0xff] %vm245, %v244
        %s247 = sand.u32 %s119, 1
        %s248 = scalar_lea.sflag [#allocation3], %s247
        %s249 = sand.u32 %s119, 1
        %s250 = smul.addr %s249, 8
        %s251 = scalar_lea.vmem [#allocation2], %s250
        // Predicated region
        $region33: #{downsample_layer.3} parent=31 // pred_check
          %p252 = pneg %p129
        $region34: #{downsample_layer.3} parent=31 // pred_check_branch
          %254 = sbr.rel (%p252) target = $region36
        $region35: #{downsample_layer.3} parent=31 // pred_region
          %s256 = ssub.s32 128, 128
          %257 = vsyncadd %s248, %s256
          %s258 = sadd.s32 %s22, %s21
          %s259 = smul.addr %s258, 128
          %s260 = scalar_lea.hbm %s3, %s259
          %s262 = sshll.u32 %s251, 4
          %s263 = int_to_ptr.vmem [resolvable:$true] %s262
          %265 = dma.vmem_to_hbm [thread:$0]  %s263, 128, %s260, %s248
        $region36: #{downsample_layer.3} parent=31 // pred_fallthru
          _
      $region32: #{downsample_layer.3} parent=5 // pred_fallthru
        _
      %p266 = scmp.le.s32.totalorder 2, %s12
      // Predicated region
      $region37: #{downsample_layer.3} parent=5 // pred_check
        %p267 = pneg %p266
      $region38: #{downsample_layer.3} parent=5 // pred_check_branch
        %269 = sbr.rel (%p267) target = $region40
      $region39: #{downsample_layer.3} parent=5 // pred_region
        %s270 = ssub.s32 %s12, 2
        // Predicated region
        $region41: #{downsample_layer.3} parent=39 // pred_check
          %p271 = pneg %p135
        $region42: #{downsample_layer.3} parent=39 // pred_check_branch
          %273 = sbr.rel (%p271) target = $region44
        $region43: #{downsample_layer.3} parent=39 // pred_region
          %s274 = sand.u32 %s120, 1
          %s275 = scalar_lea.sflag [#allocation3], %s274
          %s276 = sand.u32 %s120, 1
          %s277 = smul.addr %s276, 8
          %s278 = scalar_lea.vmem [#allocation2], %s277
          %279 = dma.done %s275, 128
        $region44: #{downsample_layer.3} parent=39 // pred_fallthru
          _
      $region40: #{downsample_layer.3} parent=5 // pred_fallthru
        _
    $region6: #{downsample_layer.3} parent=1 // loop_footer
      %s16 = sadd.s32 1, %s12
    $region7: #{downsample_layer.3} parent=1 // loop_footer_branch
      %11 = sbr.rel target = $region3
    $region8: #{downsample_layer.3} parent=1 // loop_exit
      _
    %280 = vsyncpa [#allocation3], 1
    %s281 = scalar_lea.sflag [#allocation3], 1
    %282 = vsyncpa %s281, 1

// kernel: downsample_layer.2
$region0: #{downsample_layer.2}
  #allocation0 [shape = 'u32[]', space=smem, size = 0x4, offset = 0x4, fixed_abs, tag = 'smem constant byte address 0x4 - core index']
  #allocation1 [shape = 'u32[144,128]{1,0:T(1,128)}', space=vmem, size = 0x12000, scoped, tag = 'internal scratch']
  %s0 = inlined_call_operand.vmem [shape: f32[2,12,8], index: 0, kind: input, shape index: {}]
  %s1 = inlined_call_operand.vmem [shape: f32[8,12], index: 1, kind: input, shape index: {}]
  %s2 = inlined_call_operand.vmem [shape: f32[8,1], index: 2, kind: input, shape index: {}]
  %s3 = inlined_call_operand.vmem [shape: f32[2,8,8], index: 3, kind: output, shape index: {0}]
  %s4 = inlined_call_operand.vmem [shape: f32[2,1,8], index: 4, kind: output, shape index: {1}]
  %s5 = inlined_call_operand.vmem [shape: f32[2,1,8], index: 5, kind: output, shape index: {2}]
  %6 = xla_tuple %s3, %s4, %s5
  %s7 = sld [smem:[#allocation0]]
  $region61: #{downsample_layer.2} parent=0
    _
  %s9 = ssub.s32 1, %s7
  %s10 = scalar_select 0, %s9, %s7
  loop: start=0, step=1, limit=4
  $region2: #{downsample_layer.2} parent=0 // loop_pre_header
    _
  $region3: #{downsample_layer.2} parent=0 // loop_header
    %s12 = sphi 0, %s16
    %p13 = scmp.ge.s32.totalorder %s12, 4
    %s19 = sphi 0, %s31
    %s20 = sphi 0, %s27
    %s21 = sphi 0, %s19
    %s22 = sphi 0, %s20
    %s23 = sphi 0, %s21
    %s24 = sphi 0, %s22
    %s36 = sphi 0, %s38
    %s39 = sphi 0, %s36
    %s40 = sphi 0, %s39
    %s56 = sphi 0, %s40
    %s60 = sphi 0, %s60
    %s62 = sphi 0, %s60
    %s63 = sphi 0, %s62
    %s77 = sphi 0, %s63
    %s81 = sphi 0, %s81
    %s83 = sphi 0, %s81
    %s84 = sphi 0, %s83
    %s98 = sphi 0, %s84
    %s106 = sphi 0, %s108
    %s109 = sphi 0, %s106
    %s110 = sphi 0, %s109
    %s126 = sphi 0, %s110
    %s134 = sphi 0, %s136
    %s137 = sphi 0, %s134
    %s138 = sphi 0, %s137
    %s154 = sphi 0, %s138
    %s162 = sphi 0, %s164
    %s165 = sphi 0, %s162
    %s166 = sphi 0, %s165
    %s182 = sphi 0, %s166
  $region4: #{downsample_layer.2} parent=0 // loop_header_branch
    %15 = sbr.rel (%p13) target = $region8
  $region5: #{downsample_layer.2} parent=0 // loop_body
    %s17 = ssub.s32 %s12, 1
    %s18 = ssub.s32 %s12, 2
    %s25 = sadd.s32 1, %s20
    %p26 = scmp.ge.s32.totalorder %s25, 1
    %s27 = scalar_select %p26, 0, %s25
    %s28 = sadd.s32 1, %s19
    %s29 = scalar_select %p26, %s28, %s19
    %p30 = scmp.ge.s32.totalorder %s29, 2
    %s31 = scalar_select %p30, 0, %s29
    %s32 = ssub.s32 %s19, %s31
    %s33 = ssub.s32 %s20, %s27
    %s34 = sor.u32 %s32, %s33
    %p35 = scmp.eq.s32.totalorder %s34, 0
    %s37 = sadd.s32 %s36, 1
    %s38 = scalar_select %p35, %s36, %s37
    %p41 = pneg %p35
    %p42 = scmp.eq.s32.totalorder %s12, 1
    %p43 = por %p41, %p42
    %p44 = scmp.ne.s32.totalorder %s36, %s39
    %p45 = scmp.eq.s32.totalorder %s12, 0
    %p46 = por %p44, %p45
    %p47 = scmp.ne.s32.totalorder %s36, %s39
    %p48 = scmp.eq.s32.totalorder %s17, 1
    %p49 = por %p47, %p48
    %p50 = scmp.ne.s32.totalorder %s39, %s40
    %p51 = scmp.eq.s32.totalorder %s17, 0
    %p52 = por %p50, %p51
    %p53 = scmp.ne.s32.totalorder %s39, %s40
    %p54 = scmp.eq.s32.totalorder %s18, 1
    %p55 = por %p53, %p54
    %p57 = scmp.ne.s32.totalorder %s40, %s56
    %p58 = scmp.eq.s32.totalorder %s18, 0
    %p59 = por %p57, %p58
    %s61 = sadd.s32 %s60, 1
    %p64 = scmp.eq.s32.totalorder %s12, 1
    %p65 = scmp.ne.s32.totalorder %s60, %s62
    %p66 = scmp.eq.s32.totalorder %s12, 0
    %p67 = por %p65, %p66
    %p68 = scmp.ne.s32.totalorder %s60, %s62
    %p69 = scmp.eq.s32.totalorder %s17, 1
    %p70 = por %p68, %p69
    %p71 = scmp.ne.s32.totalorder %s62, %s63
    %p72 = scmp.eq.s32.totalorder %s17, 0
    %p73 = por %p71, %p72
    %p74 = scmp.ne.s32.totalorder %s62, %s63
    %p75 = scmp.eq.s32.totalorder %s18, 1
    %p76 = por %p74, %p75
    %p78 = scmp.ne.s32.totalorder %s63, %s77
    %p79 = scmp.eq.s32.totalorder %s18, 0
    %p80 = por %p78, %p79
    %s82 = sadd.s32 %s81, 1
    %p85 = scmp.eq.s32.totalorder %s12, 1
    %p86 = scmp.ne.s32.totalorder %s81, %s83
    %p87 = scmp.eq.s32.totalorder %s12, 0
    %p88 = por %p86, %p87
    %p89 = scmp.ne.s32.totalorder %s81, %s83
    %p90 = scmp.eq.s32.totalorder %s17, 1
    %p91 = por %p89, %p90
    %p92 = scmp.ne.s32.totalorder %s83, %s84
    %p93 = scmp.eq.s32.totalorder %s17, 0
    %p94 = por %p92, %p93
    %p95 = scmp.ne.s32.totalorder %s83, %s84
    %p96 = scmp.eq.s32.totalorder %s18, 1
    %p97 = por %p95, %p96
    %p99 = scmp.ne.s32.totalorder %s84, %s98
    %p100 = scmp.eq.s32.totalorder %s18, 0
    %p101 = por %p99, %p100
    %s102 = ssub.s32 %s19, %s31
    %s103 = ssub.s32 %s20, %s27
    %s104 = sor.u32 %s102, %s103
    %p105 = scmp.eq.s32.totalorder %s104, 0
    %s107 = sadd.s32 %s106, 1
    %s108 = scalar_select %p105, %s106, %s107
    %p111 = pneg %p105
    %p112 = scmp.eq.s32.totalorder %s12, 1
    %p113 = por %p111, %p112
    %p114 = scmp.ne.s32.totalorder %s106, %s109
    %p115 = scmp.eq.s32.totalorder %s12, 0
    %p116 = por %p114, %p115
    %p117 = scmp.ne.s32.totalorder %s106, %s109
    %p118 = scmp.eq.s32.totalorder %s17, 1
    %p119 = por %p117, %p118
    %p120 = scmp.ne.s32.totalorder %s109, %s110
    %p121 = scmp.eq.s32.totalorder %s17, 0
    %p122 = por %p120, %p121
    %p123 = scmp.ne.s32.totalorder %s109, %s110
    %p124 = scmp.eq.s32.totalorder %s18, 1
    %p125 = por %p123, %p124
    %p127 = scmp.ne.s32.totalorder %s110, %s126
    %p128 = scmp.eq.s32.totalorder %s18, 0
    %p129 = por %p127, %p128
    %s130 = ssub.s32 %s19, %s31
    %s131 = ssub.s32 %s20, %s27
    %s132 = sor.u32 %s130, %s131
    %p133 = scmp.eq.s32.totalorder %s132, 0
    %s135 = sadd.s32 %s134, 1
    %s136 = scalar_select %p133, %s134, %s135
    %p139 = pneg %p133
    %p140 = scmp.eq.s32.totalorder %s12, 1
    %p141 = por %p139, %p140
    %p142 = scmp.ne.s32.totalorder %s134, %s137
    %p143 = scmp.eq.s32.totalorder %s12, 0
    %p144 = por %p142, %p143
    %p145 = scmp.ne.s32.totalorder %s134, %s137
    %p146 = scmp.eq.s32.totalorder %s17, 1
    %p147 = por %p145, %p146
    %p148 = scmp.ne.s32.totalorder %s137, %s138
    %p149 = scmp.eq.s32.totalorder %s17, 0
    %p150 = por %p148, %p149
    %p151 = scmp.ne.s32.totalorder %s137, %s138
    %p152 = scmp.eq.s32.totalorder %s18, 1
    %p153 = por %p151, %p152
    %p155 = scmp.ne.s32.totalorder %s138, %s154
    %p156 = scmp.eq.s32.totalorder %s18, 0
    %p157 = por %p155, %p156
    %s158 = ssub.s32 %s19, %s31
    %s159 = ssub.s32 %s20, %s27
    %s160 = sor.u32 %s158, %s159
    %p161 = scmp.eq.s32.totalorder %s160, 0
    %s163 = sadd.s32 %s162, 1
    %s164 = scalar_select %p161, %s162, %s163
    %p167 = pneg %p161
    %p168 = scmp.eq.s32.totalorder %s12, 1
    %p169 = por %p167, %p168
    %p170 = scmp.ne.s32.totalorder %s162, %s165
    %p171 = scmp.eq.s32.totalorder %s12, 0
    %p172 = por %p170, %p171
    %p173 = scmp.ne.s32.totalorder %s162, %s165
    %p174 = scmp.eq.s32.totalorder %s17, 1
    %p175 = por %p173, %p174
    %p176 = scmp.ne.s32.totalorder %s165, %s166
    %p177 = scmp.eq.s32.totalorder %s17, 0
    %p178 = por %p176, %p177
    %p179 = scmp.ne.s32.totalorder %s165, %s166
    %p180 = scmp.eq.s32.totalorder %s18, 1
    %p181 = por %p179, %p180
    %p183 = scmp.ne.s32.totalorder %s166, %s182
    %p184 = scmp.eq.s32.totalorder %s18, 0
    %p185 = por %p183, %p184
    %p186 = scmp.le.s32.totalorder 1, %s12
    %p187 = scmp.lt.s32.totalorder %s12, 3
    %p188 = pnand %p186, %p187
    %p189 = pneg %p188
    // Predicated region
    $region9: #{downsample_layer.2} parent=5 // pred_check
      _
    $region10: #{downsample_layer.2} parent=5 // pred_check_branch
      %191 = sbr.rel (%p188) target = $region12
    $region11: #{downsample_layer.2} parent=5 // pred_region
      %s192 = ssub.s32 %s12, 1
      // Predicated region
      $region13: #{downsample_layer.2} parent=11 // pred_check
        %p193 = pneg %p73
      $region14: #{downsample_layer.2} parent=11 // pred_check_branch
        %195 = sbr.rel (%p193) target = $region16
      $region15: #{downsample_layer.2} parent=11 // pred_region
        _
      $region16: #{downsample_layer.2} parent=11 // pred_fallthru
        _
      // Predicated region
      $region17: #{downsample_layer.2} parent=11 // pred_check
        %p196 = pneg %p94
      $region18: #{downsample_layer.2} parent=11 // pred_check_branch
        %198 = sbr.rel (%p196) target = $region20
      $region19: #{downsample_layer.2} parent=11 // pred_region
        _
      $region20: #{downsample_layer.2} parent=11 // pred_fallthru
        _
    $region12: #{downsample_layer.2} parent=5 // pred_fallthru
      _
    %p199 = scmp.lt.s32.totalorder %s12, 2
    // Predicated region
    $region21: #{downsample_layer.2} parent=5 // pred_check
      %p200 = pneg %p199
    $region22: #{downsample_layer.2} parent=5 // pred_check_branch
      %202 = sbr.rel (%p200) target = $region24
    $region23: #{downsample_layer.2} parent=5 // pred_region
      // Predicated region
      $region25: #{downsample_layer.2} parent=23 // pred_check
        %p203 = pneg %p46
      $region26: #{downsample_layer.2} parent=23 // pred_check_branch
        %205 = sbr.rel (%p203) target = $region28
      $region27: #{downsample_layer.2} parent=23 // pred_region
        %p206 = scmp.lt.s32.totalorder %s19, 1
        %s207 = scalar_select %p206, %s19, 1
        %p208 = scmp.lt.s32.totalorder %s20, 0
        %s209 = scalar_select %p208, %s20, 0
        %s210 = smul.addr %s207, 2
        %s211 = sadd.s32 %s209, %s210
        %s212 = smul.addr %s211, 8
        %s213 = scalar_lea.vmem %s0, %s212
      $region28: #{downsample_layer.2} parent=23 // pred_fallthru
        _
    $region24: #{downsample_layer.2} parent=5 // pred_fallthru
      _
    %p214 = scmp.le.s32.totalorder 1, %s12
    %p215 = scmp.lt.s32.totalorder %s12, 3
    %p216 = pnand %p214, %p215
    %p217 = pneg %p216
    // Predicated region
    $region29: #{downsample_layer.2} parent=5 // pred_check
      _
    $region30: #{downsample_layer.2} parent=5 // pred_check_branch
      %219 = sbr.rel (%p216) target = $region32
    $region31: #{downsample_layer.2} parent=5 // pred_region
      %s220 = ssub.s32 %s12, 1
      %p221 = scmp.lt.s32.totalorder %s21, 1
      %s222 = scalar_select %p221, %s21, 1
      %p223 = scmp.lt.s32.totalorder %s22, 0
      %s224 = scalar_select %p223, %s22, 0
      %s225 = smul.addr %s222, 2
      %s226 = sadd.s32 %s224, %s225
      %s227 = smul.addr %s226, 8
      %s228 = scalar_lea.vmem %s0, %s227
      %p229 = pneg %p52
      %p230 = pneg %p49
      %p231 = pneg %p73
      %p232 = pneg %p70
      %p233 = pneg %p94
      %p234 = pneg %p91
      %p235 = pneg %p122
      %p236 = pneg %p119
      %p237 = scmp.lt.s32.totalorder %s21, 1
      %s238 = scalar_select %p237, %s21, 1
      %p239 = scmp.lt.s32.totalorder %s22, 0
      %s240 = scalar_select %p239, %s22, 0
      %s241 = sadd.s32 %s240, %s238
      %s242 = smul.addr %s241, 8
      %s243 = scalar_lea.vmem %s3, %s242
      %p244 = pneg %p150
      %p245 = pneg %p147
      %p246 = scmp.lt.s32.totalorder %s21, 1
      %s247 = scalar_select %p246, %s21, 1
      %p248 = scmp.lt.s32.totalorder %s22, 0
      %s249 = scalar_select %p248, %s22, 0
      %s250 = sadd.s32 %s249, %s247
      %s251 = scalar_lea.vmem %s4, %s250
      %p252 = pneg %p178
      %p253 = pneg %p175
      %p254 = scmp.lt.s32.totalorder %s21, 1
      %s255 = scalar_select %p254, %s21, 1
      %p256 = scmp.lt.s32.totalorder %s22, 0
      %s257 = scalar_select %p256, %s22, 0
      %s258 = sadd.s32 %s257, %s255
      %s259 = scalar_lea.vmem %s5, %s258
      %p260 = scmp.lt.s32.totalorder %s21, 1
      %s261 = scalar_select %p260, %s21, 1
      %p262 = scmp.lt.s32.totalorder %s22, 0
      %s263 = scalar_select %p262, %s22, 0
      %s264 = smul.addr %s261, 2
      %s265 = sadd.s32 %s263, %s264
      %s266 = smul.addr %s265, 8
      %s267 = scalar_lea.vmem %s0, %s266
      %p268 = scmp.lt.s32.totalorder %s21, 1
      %s269 = scalar_select %p268, %s21, 1
      %p270 = scmp.lt.s32.totalorder %s22, 0
      %s271 = scalar_select %p270, %s22, 0
      %s272 = sadd.s32 %s271, %s269
      %s273 = smul.addr %s272, 8
      %s274 = scalar_lea.vmem %s3, %s273
      %p275 = scmp.lt.s32.totalorder %s21, 1
      %s276 = scalar_select %p275, %s21, 1
      %p277 = scmp.lt.s32.totalorder %s22, 0
      %s278 = scalar_select %p277, %s22, 0
      %s279 = sadd.s32 %s278, %s276
      %s280 = scalar_lea.vmem %s4, %s279
      %p281 = scmp.lt.s32.totalorder %s21, 1
      %s282 = scalar_select %p281, %s21, 1
      %p283 = scmp.lt.s32.totalorder %s22, 0
      %s284 = scalar_select %p283, %s22, 0
      %s285 = sadd.s32 %s284, %s282
      %s286 = scalar_lea.vmem %s5, %s285
      %v287 = vld [vmem:[%s1] sm:$0xff]
      %v288 = vld [vmem:[%s267] sm:$0xff]
      %v289 = vld [vmem:[%s267 + $0x8] sm:$0xf]
      %v290 = vld [vmem:[%s2] sm:$0xff]
      %292 = vset.pattern.permute.xlu0 0
      %293 = vperm.xlu0 %292, %v290
      %v294 = vpop.permute.xlu0 %293
      %vm296 = vcmask 97280
      %v298 = vsel %vm296, %v287, 0
      %vm300 = vcmask 1043456
      %v302 = vsel %vm300, %v289, 0
      %304 = vmatprep.subr.mxu0 0.0
      %305 = vmatpush1.msra.mxu0 %v288
      %306 = vmatprep.subr.mxu0 0.0
      %307 = vmatpush1.msra.mxu0 %v302
      %308 = vmatprep.subr.mxu0 0.0
      %309 = vmatpush1.msra.mxu0 0.0
      %310 = vmatprep.subr.mxu0 0.0
      %311 = vmatpush1.msra.mxu0 0.0
      %312 = vmatprep.subr.mxu0 0.0
      %313 = vmatpush1.msra.mxu0 0.0
      %314 = vmatprep.subr.mxu0 0.0
      %315 = vmatpush1.msra.mxu0 0.0
      %316 = vmatprep.subr.mxu0 0.0
      %317 = vmatpush1.msra.mxu0 0.0
      %318 = vmatprep.subr.mxu0 0.0
      %319 = vmatpush1.msra.mxu0 0.0
      %320 = vmatprep.subr.mxu0 0.0
      %321 = vmatpush1.msra.mxu0 0.0
      %322 = vmatprep.subr.mxu0 0.0
      %323 = vmatpush1.msra.mxu0 0.0
      %324 = vmatprep.subr.mxu0 0.0
      %325 = vmatpush1.msra.mxu0 0.0
      %326 = vmatprep.subr.mxu0 0.0
      %327 = vmatpush1.msra.mxu0 0.0
      %328 = vmatprep.subr.mxu0 0.0
      %329 = vmatpush1.msra.mxu0 0.0
      %330 = vmatprep.subr.mxu0 0.0
      %331 = vmatpush1.msra.mxu0 0.0
      %332 = vmatprep.subr.mxu0 0.0
      %333 = vmatpush1.msra.mxu0 0.0
      %334 = vmatprep.subr.mxu0 0.0
      %335 = vmatpush1.msra.mxu0 0.0
      %336 = vmatprep.subr.mxu0 0.0
      %337 = vmatpush1.msra.mxu0 0.0
      %338 = vmatprep.subr.mxu0 0.0
      %339 = vmatpush1.msra.mxu0 0.0
      %340 = vmatprep.subr.mxu0 0.0
      %341 = vmatpush1.msra.mxu0 0.0
      %342 = vmatprep.subr.mxu0 0.0
      %343 = vmatpush1.msra.mxu0 0.0
      %344 = vmatprep.subr.mxu0 0.0
      %345 = vmatpush1.msra.mxu0 0.0
      %346 = vmatprep.subr.mxu0 0.0
      %347 = vmatpush1.msra.mxu0 0.0
      %348 = vmatprep.subr.mxu0 0.0
      %349 = vmatpush1.msra.mxu0 0.0
      %350 = vmatprep.subr.mxu0 0.0
      %351 = vmatpush1.msra.mxu0 0.0
      %352 = vmatprep.subr.mxu0 0.0
      %353 = vmatpush1.msra.mxu0 0.0
      %354 = vmatprep.subr.mxu0 0.0
      %355 = vmatpush1.msra.mxu0 0.0
      %356 = vmatprep.subr.mxu0 0.0
      %357 = vmatpush1.msra.mxu0 0.0
      %358 = vmatprep.subr.mxu0 0.0
      %359 = vmatpush1.msra.mxu0 0.0
      %360 = vmatprep.subr.mxu0 0.0
      %361 = vmatpush1.msra.mxu0 0.0
      %362 = vmatprep.subr.mxu0 0.0
      %363 = vmatpush1.msra.mxu0 0.0
      %364 = vmatprep.subr.mxu0 0.0
      %365 = vmatpush1.msra.mxu0 0.0
      %366 = vmatprep.subr.mxu0 0.0
      %367 = vmatpush1.msra.mxu0 0.0
      %368 = vmatprep.mubr.f32.mxu0 0.0
      %369 = vmatmul.mubr.f32.gmra.mrb[0].mxu0 %v298
      %v370 = vpop.f32.mrb[0].mxu0
      %v371 = vadd.f32 %v294, %v370
      %v372 = vpop.f32.mrb[0].mxu0
      %373 = vdwg.mxu0
      %vm374 = vcmask 64512
      %375 = vst.msk [vmem:[%s274] sm:$0xff] %vm374, %v371
      %v376 = vsel %vm374, %v371, 0.0
      %377 = vadd.xlane.f32.xlu0 %v376
      %v378 = vpop.xlane.xlu0 %377
      %v380 = vlaneseq
      %v381 = vand.u32 %v380, 127
      %v382 = vlaneseq
      %v383 = vshrl.u32 %v382, 7
      %v384 = vsub.s32 %v381, %v383
      %v385 = vrot.slane %v378, %v384
      %vm387 = vcmask 57344
      %388 = vst.msk [vmem:[%s280] sm:$0x1] %vm387, %v385
      %v389 = vmul.f32 %v371, %v371
      %v390 = vsel %vm374, %v389, 0.0
      %391 = vadd.xlane.f32.xlu0 %v390
      %v392 = vpop.xlane.xlu0 %391
      %v394 = vlaneseq
      %v395 = vshrl.u32 %v394, 7
      %v396 = vsub.s32 %v381, %v395
      %v397 = vrot.slane %v392, %v396
      %399 = vst.msk [vmem:[%s286] sm:$0x1] %vm387, %v397
      %p400 = scmp.lt.s32.totalorder %s21, 1
      %s401 = scalar_select %p400, %s21, 1
      %p402 = scmp.lt.s32.totalorder %s22, 0
      %s403 = scalar_select %p402, %s22, 0
      %s404 = sadd.s32 %s403, %s401
      %s405 = smul.addr %s404, 8
      %s406 = scalar_lea.vmem %s3, %s405
      %p407 = scmp.lt.s32.totalorder %s21, 1
      %s408 = scalar_select %p407, %s21, 1
      %p409 = scmp.lt.s32.totalorder %s22, 0
      %s410 = scalar_select %p409, %s22, 0
      %s411 = sadd.s32 %s410, %s408
      %s412 = scalar_lea.vmem %s4, %s411
      %p413 = scmp.lt.s32.totalorder %s21, 1
      %s414 = scalar_select %p413, %s21, 1
      %p415 = scmp.lt.s32.totalorder %s22, 0
      %s416 = scalar_select %p415, %s22, 0
      %s417 = sadd.s32 %s416, %s414
      %s418 = scalar_lea.vmem %s5, %s417
      // Predicated region
      $region33: #{downsample_layer.2} parent=31 // pred_check
        %p419 = pneg %p119
      $region34: #{downsample_layer.2} parent=31 // pred_check_branch
        %421 = sbr.rel (%p419) target = $region36
      $region35: #{downsample_layer.2} parent=31 // pred_region
        _
      $region36: #{downsample_layer.2} parent=31 // pred_fallthru
        _
      // Predicated region
      $region37: #{downsample_layer.2} parent=31 // pred_check
        %p422 = pneg %p147
      $region38: #{downsample_layer.2} parent=31 // pred_check_branch
        %424 = sbr.rel (%p422) target = $region40
      $region39: #{downsample_layer.2} parent=31 // pred_region
        _
      $region40: #{downsample_layer.2} parent=31 // pred_fallthru
        _
      // Predicated region
      $region41: #{downsample_layer.2} parent=31 // pred_check
        %p425 = pneg %p175
      $region42: #{downsample_layer.2} parent=31 // pred_check_branch
        %427 = sbr.rel (%p425) target = $region44
      $region43: #{downsample_layer.2} parent=31 // pred_region
        _
      $region44: #{downsample_layer.2} parent=31 // pred_fallthru
        _
    $region32: #{downsample_layer.2} parent=5 // pred_fallthru
      _
    %p428 = scmp.le.s32.totalorder 2, %s12
    // Predicated region
    $region45: #{downsample_layer.2} parent=5 // pred_check
      %p429 = pneg %p428
    $region46: #{downsample_layer.2} parent=5 // pred_check_branch
      %431 = sbr.rel (%p429) target = $region48
    $region47: #{downsample_layer.2} parent=5 // pred_region
      %s432 = ssub.s32 %s12, 2
      // Predicated region
      $region49: #{downsample_layer.2} parent=47 // pred_check
        %p433 = pneg %p125
      $region50: #{downsample_layer.2} parent=47 // pred_check_branch
        %435 = sbr.rel (%p433) target = $region52
      $region51: #{downsample_layer.2} parent=47 // pred_region
        %p436 = scmp.lt.s32.totalorder %s23, 1
        %s437 = scalar_select %p436, %s23, 1
        %p438 = scmp.lt.s32.totalorder %s24, 0
        %s439 = scalar_select %p438, %s24, 0
        %s440 = sadd.s32 %s439, %s437
        %s441 = smul.addr %s440, 8
        %s442 = scalar_lea.vmem %s3, %s441
      $region52: #{downsample_layer.2} parent=47 // pred_fallthru
        _
      // Predicated region
      $region53: #{downsample_layer.2} parent=47 // pred_check
        %p443 = pneg %p153
      $region54: #{downsample_layer.2} parent=47 // pred_check_branch
        %445 = sbr.rel (%p443) target = $region56
      $region55: #{downsample_layer.2} parent=47 // pred_region
        %p446 = scmp.lt.s32.totalorder %s23, 1
        %s447 = scalar_select %p446, %s23, 1
        %p448 = scmp.lt.s32.totalorder %s24, 0
        %s449 = scalar_select %p448, %s24, 0
        %s450 = sadd.s32 %s449, %s447
        %s451 = scalar_lea.vmem %s4, %s450
      $region56: #{downsample_layer.2} parent=47 // pred_fallthru
        _
      // Predicated region
      $region57: #{downsample_layer.2} parent=47 // pred_check
        %p452 = pneg %p181
      $region58: #{downsample_layer.2} parent=47 // pred_check_branch
        %454 = sbr.rel (%p452) target = $region60
      $region59: #{downsample_layer.2} parent=47 // pred_region
        %p455 = scmp.lt.s32.totalorder %s23, 1
        %s456 = scalar_select %p455, %s23, 1
        %p457 = scmp.lt.s32.totalorder %s24, 0
        %s458 = scalar_select %p457, %s24, 0
        %s459 = sadd.s32 %s458, %s456
        %s460 = scalar_lea.vmem %s5, %s459
      $region60: #{downsample_layer.2} parent=47 // pred_fallthru
        _
    $region48: #{downsample_layer.2} parent=5 // pred_fallthru
      _
  $region6: #{downsample_layer.2} parent=0 // loop_footer
    %s16 = sadd.s32 1, %s12
  $region7: #{downsample_layer.2} parent=0 // loop_footer_branch
    %11 = sbr.rel target = $region3
  $region8: #{downsample_layer.2} parent=0 // loop_exit
    _

</llo_original>
